<compile_context>
chip_gen: v5e
topology: v5e:2x2
jax: 0.10.0
libtpu: 0.0.40
codegen_flags: <defaults>
</compile_context>

<pallas_src>
import functools

import jax
import jax.numpy as jnp
from jax.experimental import pallas as pl
from jax.experimental.pallas import tpu as pltpu

BN_EPS = 1e-5
LANE = 128      # feature (output) dims padded to multiples of this -> lane-dense stores
K_ALIGN = 128   # stored contraction dims padded to this -> tile-aligned weight DMA


def _round_up(n, m):
    return ((n + m - 1) // m) * m


# --------------------------------------------------------------------------- kernel
def _make_fused_mlp_kernel(n_layers, mm_shapes, want_feat):
    """Builds the fused kernel.

    mm_shapes: tuple of (k_true, k_stored, n_pad) for each of the n_layers + 1
    matmuls (hidden layers then classifier). k_true is the contraction width the
    dot actually uses (x's true column count for the first matmul, the padded
    activation width afterwards); k_stored/n_pad are the padded HBM weight dims.
    """

    def kernel(*refs):
        idx = 0
        x_ref = refs[idx]; idx += 1
        w_hbm, vec_refs = [], []
        for _ in range(n_layers):
            w_hbm.append(refs[idx]); idx += 1                  # weight (HBM, streamed)
            vec_refs.append(refs[idx:idx + 3]); idx += 3       # bias, gamma, beta (VMEM)
        w_hbm.append(refs[idx]); idx += 1                      # classifier weight (HBM)
        cls_b_ref = refs[idx]; idx += 1
        if want_feat:
            feat_ref, out_ref = refs[idx], refs[idx + 1]; idx += 2
        else:
            feat_ref, out_ref = None, refs[idx]; idx += 1
        wbuf, sem = refs[idx], refs[idx + 1]                   # 2-slot bf16 scratch + DMA sems

        copies = {}

        def start(i, slot):
            _, kp, np_ = mm_shapes[i]
            cp = pltpu.make_async_copy(w_hbm[i], wbuf.at[slot, :kp, :np_], sem.at[slot])
            cp.start()
            copies[i] = cp

        # Prime the pipeline with the first weight; every later weight is
        # prefetched into the other slot while the current layer computes.
        start(0, 0)

        feat = x_ref[...]                                      # (B, D) f32, unpadded
        for l in range(n_layers):
            slot = l & 1
            copies[l].wait()
            start(l + 1, 1 - slot)                             # prefetch next weight / classifier

            k_true, _, n_pad = mm_shapes[l]
            b_ref, g_ref, beta_ref = vec_refs[l]

            # bf16 MXU matmul with f32 accumulation; bias add hides under MXU slack.
            y = jnp.dot(feat.astype(jnp.bfloat16), wbuf[slot, :k_true, :n_pad],
                        preferred_element_type=jnp.float32) + b_ref[...]

            # BatchNorm1d, training mode (biased batch variance). Two-pass variance
            # for numerics; the apply is folded to one mul + one add per element
            # on the already-centered value (scale/shift math is on (1, n_pad)).
            mean = jnp.mean(y, axis=0, keepdims=True)           # (1, n_pad)
            d = y - mean
            var = jnp.mean(d * d, axis=0, keepdims=True)        # (1, n_pad)
            scale = g_ref[...] * jax.lax.rsqrt(var + BN_EPS)    # EUP rsqrt, row vector
            feat = jnp.maximum(d * scale + beta_ref[...], 0.0)  # BN apply + ReLU

        if want_feat:
            feat_ref[...] = feat                                # lane-dense full-width store

        cls_i = n_layers
        copies[cls_i].wait()
        k_true, _, n_pad = mm_shapes[cls_i]
        out_ref[...] = jnp.dot(feat.astype(jnp.bfloat16),
                               wbuf[cls_i & 1, :k_true, :n_pad],
                               preferred_element_type=jnp.float32) + cls_b_ref[...]

    return kernel


# --------------------------------------------------------------------------- params
def init_class_mlp_params(key, in_dim, hidden_dim, n_classes, n_layers):
    """PyTorch-layout parameters (Linear weight = (out, in)), uniform init."""
    params = {"layers": []}
    d = in_dim
    for _ in range(n_layers):
        key, k_w, k_b = jax.random.split(key, 3)
        bound = 1.0 / jnp.sqrt(d)
        params["layers"].append(
            dict(
                w=jax.random.uniform(k_w, (hidden_dim, d), jnp.float32, -bound, bound),
                b=jax.random.uniform(k_b, (hidden_dim,), jnp.float32, -bound, bound),
                gamma=jnp.ones((hidden_dim,), jnp.float32),
                beta=jnp.zeros((hidden_dim,), jnp.float32),
            )
        )
        d = hidden_dim
    key, k_w, k_b = jax.random.split(key, 3)
    bound = 1.0 / jnp.sqrt(d)
    params["cls_w"] = jax.random.uniform(k_w, (n_classes, d), jnp.float32, -bound, bound)
    params["cls_b"] = jax.random.uniform(k_b, (n_classes,), jnp.float32, -bound, bound)
    return params


def _pad2(a, rows, cols, dtype):
    out = jnp.zeros((rows, cols), dtype)
    return out.at[: a.shape[0], : a.shape[1]].set(a.astype(dtype))


def pack_params(params):
    """One-time (outside jit): transpose weights to (in, out), pad to tile-aligned
    shapes, and store matmul weights in bf16 (MXU-native on every TPU gen)."""
    packed = {"layers": []}
    for layer in params["layers"]:
        out_d, in_d = layer["w"].shape
        kp, np_ = _round_up(in_d, K_ALIGN), _round_up(out_d, LANE)
        packed["layers"].append(
            dict(
                w_t=_pad2(layer["w"].T, kp, np_, jnp.bfloat16),            # (K_pad, H_pad) bf16
                b=_pad2(layer["b"].reshape(1, -1), 1, np_, jnp.float32),
                gamma=_pad2(layer["gamma"].reshape(1, -1), 1, np_, jnp.float32),
                beta=_pad2(layer["beta"].reshape(1, -1), 1, np_, jnp.float32),
            )
        )
    c, d = params["cls_w"].shape
    kp, cp = _round_up(d, K_ALIGN), _round_up(c, LANE)
    packed["cls_w_t"] = _pad2(params["cls_w"].T, kp, cp, jnp.bfloat16)     # (K_pad, C_pad) bf16
    packed["cls_b"] = _pad2(params["cls_b"].reshape(1, -1), 1, cp, jnp.float32)
    return packed


# --------------------------------------------------------------------------- forward
@functools.partial(jax.jit, static_argnames=("hidden_dim", "n_classes", "want_feat"))
def class_mlp_forward(packed, x, *, hidden_dim, n_classes, want_feat=True):
    B, D = x.shape
    if B == 0:
        raise ValueError("empty batch: training-mode BatchNorm statistics are undefined")
    n_layers = len(packed["layers"])

    # Static per-matmul shapes: (true contraction width, stored/padded contraction
    # width of the HBM weight, padded output width).
    mm_shapes = []
    k_true = D
    for lyr in packed["layers"]:
        kp, np_ = lyr["w_t"].shape
        mm_shapes.append((k_true, kp, np_))
        k_true = np_                      # next layer consumes padded activations
    kp, c_pad = packed["cls_w_t"].shape
    mm_shapes.append((k_true, kp, c_pad))

    feat_width = mm_shapes[-2][2] if n_layers else D          # H_pad, or D (identity path)
    feat_true = hidden_dim if n_layers else D

    k_max = max(s[1] for s in mm_shapes)
    n_max = max(s[2] for s in mm_shapes)

    # Resident VMEM footprint: double-buffered bf16 weight slab + unpadded input
    # + a few live f32 activations + outputs + tiny per-feature vectors.
    resident = (2 * k_max * n_max * 2                 # weight double buffer (bf16)
                + B * D * 4                           # input
                + 4 * B * n_max * 4                   # live activations (y, d, feat, ...)
                + B * (feat_width + c_pad) * 4        # outputs
                + (3 * n_layers + 1) * n_max * 4)     # bias/gamma/beta/cls_b vectors
    vmem_limit = int(min(max(2 * resident, 16 * 2**20), 100 * 2**20))

    vmem = pl.BlockSpec(memory_space=pltpu.MemorySpace.VMEM)
    hbm = pl.BlockSpec(memory_space=pl.ANY)            # streamed weights stay in HBM

    inputs, in_specs = [x], [vmem]
    for lyr in packed["layers"]:
        inputs += [lyr["w_t"], lyr["b"], lyr["gamma"], lyr["beta"]]
        in_specs += [hbm, vmem, vmem, vmem]
    inputs += [packed["cls_w_t"], packed["cls_b"]]
    in_specs += [hbm, vmem]

    out_shape = jax.ShapeDtypeStruct((B, c_pad), jnp.float32)
    out_specs = vmem
    if want_feat:
        out_shape = (jax.ShapeDtypeStruct((B, feat_width), jnp.float32), out_shape)
        out_specs = (vmem, vmem)

    res = pl.pallas_call(
        _make_fused_mlp_kernel(n_layers, tuple(mm_shapes), want_feat),
        out_shape=out_shape,
        in_specs=in_specs,
        out_specs=out_specs,
        scratch_shapes=[
            pltpu.VMEM((2, k_max, n_max), jnp.bfloat16),   # 2-slot streamed-weight buffer
            pltpu.SemaphoreType.DMA((2,)),
        ],
        compiler_params=pltpu.CompilerParams(vmem_limit_bytes=vmem_limit),
    )(*inputs)

    if want_feat:
        feat_pad, out_pad = res
        return feat_pad[:, :feat_true], out_pad[:, :n_classes]
    return res[:, :n_classes]


# pure-JAX reference (PyTorch layout). matmul_dtype=bf16 reproduces the kernel's
# MXU numerics exactly; f32 gives strict PyTorch-parity math.
def class_mlp_reference(params, x, *, matmul_dtype=jnp.float32):
    def mm(a, w):
        return jnp.dot(a.astype(matmul_dtype), w.T.astype(matmul_dtype),
                       preferred_element_type=jnp.float32)

    feat = x
    for layer in params["layers"]:
        y = mm(feat, layer["w"]) + layer["b"]
        mean = jnp.mean(y, axis=0, keepdims=True)
        var = jnp.mean((y - mean) ** 2, axis=0, keepdims=True)
        y = (y - mean) / jnp.sqrt(var + BN_EPS)
        y = y * layer["gamma"] + layer["beta"]
        feat = jnp.maximum(y, 0.0)
    out = mm(feat, params["cls_w"]) + params["cls_b"]
    return feat, out


# --------------------------------------------------------------------------- main
if __name__ == "__main__":
    B, IN_DIM, HIDDEN, N_CLASSES, N_LAYERS = 8, 32, 32, 8, 2

    key = jax.random.PRNGKey(0)
    key, k_x = jax.random.split(key)
    x = jax.random.normal(k_x, (B, IN_DIM), jnp.float32)

    params = init_class_mlp_params(key, IN_DIM, HIDDEN, N_CLASSES, N_LAYERS)
    packed = pack_params(params)   # one-time transpose + pad + bf16 cast, outside jit

    feat, out = class_mlp_forward(packed, x, hidden_dim=HIDDEN, n_classes=N_CLASSES,
                                  want_feat=True)
    jax.block_until_ready((feat, out))
    assert feat.shape == (B, HIDDEN) and out.shape == (B, N_CLASSES)

    # Tight check vs. a reference that matches the kernel numerics (bf16 matmul,
    # f32 accumulation / BN).
    feat_mr, out_mr = class_mlp_reference(params, x, matmul_dtype=jnp.bfloat16)
    assert jnp.allclose(feat, feat_mr, atol=2e-3, rtol=2e-3)
    assert jnp.allclose(out, out_mr, atol=2e-3, rtol=2e-3)

    # Looser sanity check vs. the pure-f32 PyTorch-parity reference (bf16 matmul
    # rounding is the only deliberate deviation).
    feat_f32, out_f32 = class_mlp_reference(params, x)
    assert jnp.allclose(feat, feat_f32, atol=1e-1, rtol=1e-1)
    assert jnp.allclose(out, out_f32, atol=1e-1, rtol=1e-1)

    print("KERNEL_OK")
</pallas_src>

<mosaic_0001>
module attributes {stable_mosaic.version = 11 : i64} {
  func.func @kernel(%arg0: memref<8x32xf32, #tpu.memory_space<vmem>>, %arg1: memref<128x128xbf16, #tpu.memory_space<any>>, %arg2: memref<1x128xf32, #tpu.memory_space<vmem>>, %arg3: memref<1x128xf32, #tpu.memory_space<vmem>>, %arg4: memref<1x128xf32, #tpu.memory_space<vmem>>, %arg5: memref<128x128xbf16, #tpu.memory_space<any>>, %arg6: memref<1x128xf32, #tpu.memory_space<vmem>>, %arg7: memref<1x128xf32, #tpu.memory_space<vmem>>, %arg8: memref<1x128xf32, #tpu.memory_space<vmem>>, %arg9: memref<128x128xbf16, #tpu.memory_space<any>>, %arg10: memref<1x128xf32, #tpu.memory_space<vmem>>, %arg11: memref<8x128xf32, #tpu.memory_space<vmem>>, %arg12: memref<8x128xf32, #tpu.memory_space<vmem>>, %arg13: memref<2x128x128xbf16, #tpu.memory_space<vmem>>, %arg14: memref<2x!tpu.dma_semaphore, #tpu.memory_space<semaphore_mem>>) attributes {dimension_semantics = [], scalar_prefetch = 0 : i64, scratch_operands = 2 : i64, tpu.core_type = #tpu.core_type<tc>} {
    %c0_i32 = arith.constant 0 : i32
    %c0_i32_0 = arith.constant 0 : i32
    %c0_i32_1 = arith.constant 0 : i32
    %c0_i32_2 = arith.constant 0 : i32
    %0 = tpu.memref_slice %arg13[%c0_i32, %c0_i32_1, %c0_i32_2] : memref<2x128x128xbf16, #tpu.memory_space<vmem>> -> memref<1x128x128xbf16, #tpu.memory_space<vmem>>
    %1 = tpu.memref_squeeze %0 : memref<1x128x128xbf16, #tpu.memory_space<vmem>> -> memref<128x128xbf16, #tpu.memory_space<vmem>>
    %2 = tpu.memref_slice %arg14[%c0_i32_0] : memref<2x!tpu.dma_semaphore, #tpu.memory_space<semaphore_mem>> -> memref<1x!tpu.dma_semaphore, #tpu.memory_space<semaphore_mem>>
    %3 = tpu.memref_squeeze %2 : memref<1x!tpu.dma_semaphore, #tpu.memory_space<semaphore_mem>> -> memref<!tpu.dma_semaphore, #tpu.memory_space<semaphore_mem>>
    tpu.enqueue_dma source(%arg1 : memref<128x128xbf16, #tpu.memory_space<any>>) target(%1 : memref<128x128xbf16, #tpu.memory_space<vmem>>) target_semaphore(%3 : memref<!tpu.dma_semaphore, #tpu.memory_space<semaphore_mem>>)
    %c0 = arith.constant 0 : index
    %c0_3 = arith.constant 0 : index
    %4 = vector.load %arg0[%c0, %c0_3] : memref<8x32xf32, #tpu.memory_space<vmem>>, vector<8x32xf32>
    %c0_i32_4 = arith.constant 0 : i32
    %c0_i32_5 = arith.constant 0 : i32
    %c0_i32_6 = arith.constant 0 : i32
    %c0_i32_7 = arith.constant 0 : i32
    %5 = tpu.memref_slice %arg13[%c0_i32_4, %c0_i32_6, %c0_i32_7] : memref<2x128x128xbf16, #tpu.memory_space<vmem>> -> memref<1x128x128xbf16, #tpu.memory_space<vmem>>
    %6 = tpu.memref_squeeze %5 : memref<1x128x128xbf16, #tpu.memory_space<vmem>> -> memref<128x128xbf16, #tpu.memory_space<vmem>>
    %7 = tpu.memref_slice %arg14[%c0_i32_5] : memref<2x!tpu.dma_semaphore, #tpu.memory_space<semaphore_mem>> -> memref<1x!tpu.dma_semaphore, #tpu.memory_space<semaphore_mem>>
    %8 = tpu.memref_squeeze %7 : memref<1x!tpu.dma_semaphore, #tpu.memory_space<semaphore_mem>> -> memref<!tpu.dma_semaphore, #tpu.memory_space<semaphore_mem>>
    tpu.wait_dma2 semaphore(%8 : memref<!tpu.dma_semaphore, #tpu.memory_space<semaphore_mem>>) src(%arg1 : memref<128x128xbf16, #tpu.memory_space<any>>) dst(%6 : memref<128x128xbf16, #tpu.memory_space<vmem>>)
    %c1_i32 = arith.constant 1 : i32
    %c1_i32_8 = arith.constant 1 : i32
    %c0_i32_9 = arith.constant 0 : i32
    %c0_i32_10 = arith.constant 0 : i32
    %9 = tpu.memref_slice %arg13[%c1_i32, %c0_i32_9, %c0_i32_10] : memref<2x128x128xbf16, #tpu.memory_space<vmem>> -> memref<1x128x128xbf16, #tpu.memory_space<vmem>>
    %10 = tpu.memref_squeeze %9 : memref<1x128x128xbf16, #tpu.memory_space<vmem>> -> memref<128x128xbf16, #tpu.memory_space<vmem>>
    %11 = tpu.memref_slice %arg14[%c1_i32_8] : memref<2x!tpu.dma_semaphore, #tpu.memory_space<semaphore_mem>> -> memref<1x!tpu.dma_semaphore, #tpu.memory_space<semaphore_mem>>
    %12 = tpu.memref_squeeze %11 : memref<1x!tpu.dma_semaphore, #tpu.memory_space<semaphore_mem>> -> memref<!tpu.dma_semaphore, #tpu.memory_space<semaphore_mem>>
    tpu.enqueue_dma source(%arg5 : memref<128x128xbf16, #tpu.memory_space<any>>) target(%10 : memref<128x128xbf16, #tpu.memory_space<vmem>>) target_semaphore(%12 : memref<!tpu.dma_semaphore, #tpu.memory_space<semaphore_mem>>)
    %13 = arith.truncf %4 : vector<8x32xf32> to vector<8x32xbf16>
    %c0_11 = arith.constant 0 : index
    %c0_12 = arith.constant 0 : index
    %c0_13 = arith.constant 0 : index
    %14 = vector.load %arg13[%c0_11, %c0_12, %c0_13] : memref<2x128x128xbf16, #tpu.memory_space<vmem>>, vector<1x32x128xbf16>
    %15 = vector.shape_cast %14 : vector<1x32x128xbf16> to vector<32x128xbf16>
    %cst = arith.constant dense<0.000000e+00> : vector<8x128xf32>
    %16 = tpu.matmul %13, %15, %cst {dimension_numbers = #tpu.dot_dimension_numbers<[1], [0], [0], [1], [0, 0, 1, 1], [], []>} : vector<8x32xbf16>, vector<32x128xbf16>, vector<8x128xf32> -> vector<8x128xf32>
    %c0_14 = arith.constant 0 : index
    %c0_15 = arith.constant 0 : index
    %17 = vector.load %arg2[%c0_14, %c0_15] : memref<1x128xf32, #tpu.memory_space<vmem>>, vector<1x128xf32>
    %18 = vector.broadcast %17 : vector<1x128xf32> to vector<8x128xf32>
    %19 = arith.addf %16, %18 : vector<8x128xf32>
    %cst_16 = arith.constant dense<0.000000e+00> : vector<128xf32>
    %20 = vector.multi_reduction <add>, %19, %cst_16 [0] : vector<8x128xf32> to vector<128xf32>
    %21 = vector.shape_cast %20 : vector<128xf32> to vector<1x128xf32>
    %cst_17 = arith.constant 8.000000e+00 : f32
    %22 = vector.broadcast %cst_17 : f32 to vector<1x128xf32>
    %23 = arith.divf %21, %22 : vector<1x128xf32>
    %24 = vector.broadcast %23 : vector<1x128xf32> to vector<8x128xf32>
    %25 = arith.subf %19, %24 : vector<8x128xf32>
    %26 = arith.mulf %25, %25 : vector<8x128xf32>
    %cst_18 = arith.constant dense<0.000000e+00> : vector<128xf32>
    %27 = vector.multi_reduction <add>, %26, %cst_18 [0] : vector<8x128xf32> to vector<128xf32>
    %28 = vector.shape_cast %27 : vector<128xf32> to vector<1x128xf32>
    %cst_19 = arith.constant 8.000000e+00 : f32
    %29 = vector.broadcast %cst_19 : f32 to vector<1x128xf32>
    %30 = arith.divf %28, %29 : vector<1x128xf32>
    %c0_20 = arith.constant 0 : index
    %c0_21 = arith.constant 0 : index
    %31 = vector.load %arg3[%c0_20, %c0_21] : memref<1x128xf32, #tpu.memory_space<vmem>>, vector<1x128xf32>
    %cst_22 = arith.constant 9.99999974E-6 : f32
    %32 = vector.broadcast %cst_22 : f32 to vector<1x128xf32>
    %33 = arith.addf %30, %32 : vector<1x128xf32>
    %34 = math.rsqrt %33 : vector<1x128xf32>
    %35 = arith.mulf %31, %34 : vector<1x128xf32>
    %36 = vector.broadcast %35 : vector<1x128xf32> to vector<8x128xf32>
    %37 = arith.mulf %25, %36 : vector<8x128xf32>
    %c0_23 = arith.constant 0 : index
    %c0_24 = arith.constant 0 : index
    %38 = vector.load %arg4[%c0_23, %c0_24] : memref<1x128xf32, #tpu.memory_space<vmem>>, vector<1x128xf32>
    %39 = vector.broadcast %38 : vector<1x128xf32> to vector<8x128xf32>
    %40 = arith.addf %37, %39 : vector<8x128xf32>
    %cst_25 = arith.constant 0.000000e+00 : f32
    %41 = vector.broadcast %cst_25 : f32 to vector<8x128xf32>
    %42 = arith.maximumf %40, %41 : vector<8x128xf32>
    %c1_i32_26 = arith.constant 1 : i32
    %c1_i32_27 = arith.constant 1 : i32
    %c0_i32_28 = arith.constant 0 : i32
    %c0_i32_29 = arith.constant 0 : i32
    %43 = tpu.memref_slice %arg13[%c1_i32_26, %c0_i32_28, %c0_i32_29] : memref<2x128x128xbf16, #tpu.memory_space<vmem>> -> memref<1x128x128xbf16, #tpu.memory_space<vmem>>
    %44 = tpu.memref_squeeze %43 : memref<1x128x128xbf16, #tpu.memory_space<vmem>> -> memref<128x128xbf16, #tpu.memory_space<vmem>>
    %45 = tpu.memref_slice %arg14[%c1_i32_27] : memref<2x!tpu.dma_semaphore, #tpu.memory_space<semaphore_mem>> -> memref<1x!tpu.dma_semaphore, #tpu.memory_space<semaphore_mem>>
    %46 = tpu.memref_squeeze %45 : memref<1x!tpu.dma_semaphore, #tpu.memory_space<semaphore_mem>> -> memref<!tpu.dma_semaphore, #tpu.memory_space<semaphore_mem>>
    tpu.wait_dma2 semaphore(%46 : memref<!tpu.dma_semaphore, #tpu.memory_space<semaphore_mem>>) src(%arg5 : memref<128x128xbf16, #tpu.memory_space<any>>) dst(%44 : memref<128x128xbf16, #tpu.memory_space<vmem>>)
    %c0_i32_30 = arith.constant 0 : i32
    %c0_i32_31 = arith.constant 0 : i32
    %c0_i32_32 = arith.constant 0 : i32
    %c0_i32_33 = arith.constant 0 : i32
    %47 = tpu.memref_slice %arg13[%c0_i32_30, %c0_i32_32, %c0_i32_33] : memref<2x128x128xbf16, #tpu.memory_space<vmem>> -> memref<1x128x128xbf16, #tpu.memory_space<vmem>>
    %48 = tpu.memref_squeeze %47 : memref<1x128x128xbf16, #tpu.memory_space<vmem>> -> memref<128x128xbf16, #tpu.memory_space<vmem>>
    %49 = tpu.memref_slice %arg14[%c0_i32_31] : memref<2x!tpu.dma_semaphore, #tpu.memory_space<semaphore_mem>> -> memref<1x!tpu.dma_semaphore, #tpu.memory_space<semaphore_mem>>
    %50 = tpu.memref_squeeze %49 : memref<1x!tpu.dma_semaphore, #tpu.memory_space<semaphore_mem>> -> memref<!tpu.dma_semaphore, #tpu.memory_space<semaphore_mem>>
    tpu.enqueue_dma source(%arg9 : memref<128x128xbf16, #tpu.memory_space<any>>) target(%48 : memref<128x128xbf16, #tpu.memory_space<vmem>>) target_semaphore(%50 : memref<!tpu.dma_semaphore, #tpu.memory_space<semaphore_mem>>)
    %51 = arith.truncf %42 : vector<8x128xf32> to vector<8x128xbf16>
    %c1 = arith.constant 1 : index
    %c0_34 = arith.constant 0 : index
    %c0_35 = arith.constant 0 : index
    %52 = vector.load %arg13[%c1, %c0_34, %c0_35] : memref<2x128x128xbf16, #tpu.memory_space<vmem>>, vector<1x128x128xbf16>
    %53 = vector.shape_cast %52 : vector<1x128x128xbf16> to vector<128x128xbf16>
    %cst_36 = arith.constant dense<0.000000e+00> : vector<8x128xf32>
    %54 = tpu.matmul %51, %53, %cst_36 {dimension_numbers = #tpu.dot_dimension_numbers<[1], [0], [0], [1], [0, 0, 1, 1], [], []>} : vector<8x128xbf16>, vector<128x128xbf16>, vector<8x128xf32> -> vector<8x128xf32>
    %c0_37 = arith.constant 0 : index
    %c0_38 = arith.constant 0 : index
    %55 = vector.load %arg6[%c0_37, %c0_38] : memref<1x128xf32, #tpu.memory_space<vmem>>, vector<1x128xf32>
    %56 = vector.broadcast %55 : vector<1x128xf32> to vector<8x128xf32>
    %57 = arith.addf %54, %56 : vector<8x128xf32>
    %cst_39 = arith.constant dense<0.000000e+00> : vector<128xf32>
    %58 = vector.multi_reduction <add>, %57, %cst_39 [0] : vector<8x128xf32> to vector<128xf32>
    %59 = vector.shape_cast %58 : vector<128xf32> to vector<1x128xf32>
    %cst_40 = arith.constant 8.000000e+00 : f32
    %60 = vector.broadcast %cst_40 : f32 to vector<1x128xf32>
    %61 = arith.divf %59, %60 : vector<1x128xf32>
    %62 = vector.broadcast %61 : vector<1x128xf32> to vector<8x128xf32>
    %63 = arith.subf %57, %62 : vector<8x128xf32>
    %64 = arith.mulf %63, %63 : vector<8x128xf32>
    %cst_41 = arith.constant dense<0.000000e+00> : vector<128xf32>
    %65 = vector.multi_reduction <add>, %64, %cst_41 [0] : vector<8x128xf32> to vector<128xf32>
    %66 = vector.shape_cast %65 : vector<128xf32> to vector<1x128xf32>
    %cst_42 = arith.constant 8.000000e+00 : f32
    %67 = vector.broadcast %cst_42 : f32 to vector<1x128xf32>
    %68 = arith.divf %66, %67 : vector<1x128xf32>
    %c0_43 = arith.constant 0 : index
    %c0_44 = arith.constant 0 : index
    %69 = vector.load %arg7[%c0_43, %c0_44] : memref<1x128xf32, #tpu.memory_space<vmem>>, vector<1x128xf32>
    %cst_45 = arith.constant 9.99999974E-6 : f32
    %70 = vector.broadcast %cst_45 : f32 to vector<1x128xf32>
    %71 = arith.addf %68, %70 : vector<1x128xf32>
    %72 = math.rsqrt %71 : vector<1x128xf32>
    %73 = arith.mulf %69, %72 : vector<1x128xf32>
    %74 = vector.broadcast %73 : vector<1x128xf32> to vector<8x128xf32>
    %75 = arith.mulf %63, %74 : vector<8x128xf32>
    %c0_46 = arith.constant 0 : index
    %c0_47 = arith.constant 0 : index
    %76 = vector.load %arg8[%c0_46, %c0_47] : memref<1x128xf32, #tpu.memory_space<vmem>>, vector<1x128xf32>
    %77 = vector.broadcast %76 : vector<1x128xf32> to vector<8x128xf32>
    %78 = arith.addf %75, %77 : vector<8x128xf32>
    %cst_48 = arith.constant 0.000000e+00 : f32
    %79 = vector.broadcast %cst_48 : f32 to vector<8x128xf32>
    %80 = arith.maximumf %78, %79 : vector<8x128xf32>
    %c0_49 = arith.constant 0 : index
    %c0_50 = arith.constant 0 : index
    %81 = vector.load %arg11[%c0_49, %c0_50] : memref<8x128xf32, #tpu.memory_space<vmem>>, vector<8x128xf32>
    tpu.vector_store %arg11[%c0_49, %c0_50], %80 {strides = array<i32>} : memref<8x128xf32, #tpu.memory_space<vmem>>, vector<8x128xf32>,
    %c0_i32_51 = arith.constant 0 : i32
    %c0_i32_52 = arith.constant 0 : i32
    %c0_i32_53 = arith.constant 0 : i32
    %c0_i32_54 = arith.constant 0 : i32
    %82 = tpu.memref_slice %arg13[%c0_i32_51, %c0_i32_53, %c0_i32_54] : memref<2x128x128xbf16, #tpu.memory_space<vmem>> -> memref<1x128x128xbf16, #tpu.memory_space<vmem>>
    %83 = tpu.memref_squeeze %82 : memref<1x128x128xbf16, #tpu.memory_space<vmem>> -> memref<128x128xbf16, #tpu.memory_space<vmem>>
    %84 = tpu.memref_slice %arg14[%c0_i32_52] : memref<2x!tpu.dma_semaphore, #tpu.memory_space<semaphore_mem>> -> memref<1x!tpu.dma_semaphore, #tpu.memory_space<semaphore_mem>>
    %85 = tpu.memref_squeeze %84 : memref<1x!tpu.dma_semaphore, #tpu.memory_space<semaphore_mem>> -> memref<!tpu.dma_semaphore, #tpu.memory_space<semaphore_mem>>
    tpu.wait_dma2 semaphore(%85 : memref<!tpu.dma_semaphore, #tpu.memory_space<semaphore_mem>>) src(%arg9 : memref<128x128xbf16, #tpu.memory_space<any>>) dst(%83 : memref<128x128xbf16, #tpu.memory_space<vmem>>)
    %86 = arith.truncf %80 : vector<8x128xf32> to vector<8x128xbf16>
    %c0_55 = arith.constant 0 : index
    %c0_56 = arith.constant 0 : index
    %c0_57 = arith.constant 0 : index
    %87 = vector.load %arg13[%c0_55, %c0_56, %c0_57] : memref<2x128x128xbf16, #tpu.memory_space<vmem>>, vector<1x128x128xbf16>
    %88 = vector.shape_cast %87 : vector<1x128x128xbf16> to vector<128x128xbf16>
    %cst_58 = arith.constant dense<0.000000e+00> : vector<8x128xf32>
    %89 = tpu.matmul %86, %88, %cst_58 {dimension_numbers = #tpu.dot_dimension_numbers<[1], [0], [0], [1], [0, 0, 1, 1], [], []>} : vector<8x128xbf16>, vector<128x128xbf16>, vector<8x128xf32> -> vector<8x128xf32>
    %c0_59 = arith.constant 0 : index
    %c0_60 = arith.constant 0 : index
    %90 = vector.load %arg10[%c0_59, %c0_60] : memref<1x128xf32, #tpu.memory_space<vmem>>, vector<1x128xf32>
    %91 = vector.broadcast %90 : vector<1x128xf32> to vector<8x128xf32>
    %92 = arith.addf %89, %91 : vector<8x128xf32>
    %c0_61 = arith.constant 0 : index
    %c0_62 = arith.constant 0 : index
    %93 = vector.load %arg12[%c0_61, %c0_62] : memref<8x128xf32, #tpu.memory_space<vmem>>, vector<8x128xf32>
    tpu.vector_store %arg12[%c0_61, %c0_62], %92 {strides = array<i32>} : memref<8x128xf32, #tpu.memory_space<vmem>>, vector<8x128xf32>,
    return
  }
}

</mosaic_0001>

<llo_original>
// kernel: class_mlp_forward.1
$region0: #{class_mlp_forward.1}
  #allocation0 [shape = 'u32[]', space=smem, size = 0x4, offset = 0x4, fixed_abs, tag = 'smem constant byte address 0x4 - core index']
  #allocation1 [shape = 'u32[72,128]{1,0:T(1,128)}', space=vmem, size = 0x9000, scoped, tag = 'internal scratch']
  #allocation2 [shape = 'bf16[2,128,128]{2,1,0:T(8,128)(2,1)}', space=vmem, size = 0x10000, scoped, tag = 'scratch operand']
  #allocation3 [shape = 's32[2]{0}', space=sflag, size = 0x8, scoped, tag = 'scratch operand']
  #allocation18 [shape = 's32[]', space=sflag, size = 0x4, offset = 0, fixed_abs, tag = 'sflag constant byte address 0x0 - dummy sync flag']
  #allocation19 [shape = 's32[]', space=sflag, size = 0x4, offset = 0, fixed_abs, tag = 'sflag constant byte address 0x0 - dummy sync flag']
  #allocation20 [shape = 'u32[]', space=smem, size = 0x4, offset = 0x44, fixed_abs, tag = 'smem constant byte address 0x44 - assertion arg 0']
  #allocation21 [shape = 'u32[]', space=smem, size = 0x4, offset = 0x48, fixed_abs, tag = 'smem constant byte address 0x48 - assertion arg 1']
  #allocation22 [shape = 's32[]', space=sflag, size = 0x4, offset = 0, fixed_abs, tag = 'sflag constant byte address 0x0 - dummy sync flag']
  #allocation23 [shape = 's32[]', space=sflag, size = 0x4, offset = 0, fixed_abs, tag = 'sflag constant byte address 0x0 - dummy sync flag']
  #allocation24 [shape = 's32[]', space=sflag, size = 0x4, offset = 0, fixed_abs, tag = 'sflag constant byte address 0x0 - dummy sync flag']
  #allocation25 [shape = 's32[]', space=sflag, size = 0x4, offset = 0, fixed_abs, tag = 'sflag constant byte address 0x0 - dummy sync flag']
  %s0 = inlined_call_operand.vmem [shape: f32[8,32], index: 0, kind: input, shape index: {}]
  %s1 = inlined_call_operand.hbm [shape: bf16[128,128], index: 1, kind: input, shape index: {}]
  %s2 = inlined_call_operand.vmem [shape: f32[1,128], index: 2, kind: input, shape index: {}]
  %s3 = inlined_call_operand.hbm [shape: f32[1,128], index: 3, kind: input, shape index: {}]
  %s4 = inlined_call_operand.hbm [shape: f32[1,128], index: 4, kind: input, shape index: {}]
  %s5 = inlined_call_operand.hbm [shape: bf16[128,128], index: 5, kind: input, shape index: {}]
  %s6 = inlined_call_operand.hbm [shape: f32[1,128], index: 6, kind: input, shape index: {}]
  %s7 = inlined_call_operand.hbm [shape: f32[1,128], index: 7, kind: input, shape index: {}]
  %s8 = inlined_call_operand.hbm [shape: f32[1,128], index: 8, kind: input, shape index: {}]
  %s9 = inlined_call_operand.hbm [shape: bf16[128,128], index: 9, kind: input, shape index: {}]
  %s10 = inlined_call_operand.hbm [shape: f32[1,128], index: 10, kind: input, shape index: {}]
  %s11 = inlined_call_operand.hbm [shape: f32[8,128], index: 11, kind: output, shape index: {0}]
  %s12 = inlined_call_operand.hbm [shape: f32[8,128], index: 12, kind: output, shape index: {1}]
  %13 = xla_tuple %s11, %s12
  %s14 = sld [smem:[#allocation0]]
  $region86: #{class_mlp_forward.1} parent=0
    _
  %s16 = ssub.s32 1, %s14
  %s17 = scalar_select 0, %s16, %s14
  $region1: #{class_mlp_forward.1} parent=0
    #allocation4 [shape = 'u8[512]{0}', space=vmem, size = 0x400, scoped, tag = 'input window, operand 3, single buffered']
    #allocation5 [shape = 's32[1]{0}', space=sflag, size = 0x4, scoped, tag = 'scoped memory for class_mlp_forward.1']
    #allocation6 [shape = 's32[1]{0}', space=sflag, size = 0x4, scoped, tag = 'scoped memory for class_mlp_forward.1']
    #allocation7 [shape = 'u8[512]{0}', space=vmem, size = 0x400, scoped, tag = 'input window, operand 4, single buffered']
    #allocation8 [shape = 's32[1]{0}', space=sflag, size = 0x4, scoped, tag = 'scoped memory for class_mlp_forward.1']
    #allocation9 [shape = 'u8[512]{0}', space=vmem, size = 0x400, scoped, tag = 'input window, operand 6, single buffered']
    #allocation10 [shape = 'u8[512]{0}', space=vmem, size = 0x400, scoped, tag = 'input window, operand 7, single buffered']
    #allocation11 [shape = 's32[1]{0}', space=sflag, size = 0x4, scoped, tag = 'scoped memory for class_mlp_forward.1']
    #allocation12 [shape = 'u8[512]{0}', space=vmem, size = 0x400, scoped, tag = 'input window, operand 8, single buffered']
    #allocation13 [shape = 'u8[512]{0}', space=vmem, size = 0x400, scoped, tag = 'input window, operand 10, single buffered']
    #allocation14 [shape = 's32[1]{0}', space=sflag, size = 0x4, scoped, tag = 'scoped memory for class_mlp_forward.1']
    #allocation15 [shape = 'u8[4096]{0}', space=vmem, size = 0x1000, scoped, tag = 'output window, operand 0, single buffered']
    #allocation16 [shape = 'u8[4096]{0}', space=vmem, size = 0x1000, scoped, tag = 'output window, operand 1, single buffered']
    #allocation17 [shape = 's32[1]{0}', space=sflag, size = 0x4, scoped, tag = 'scoped memory for class_mlp_forward.1']
    %18 = vsyncpa [#allocation5], 0
    %19 = vsyncpa [#allocation8], 0
    %20 = vsyncpa [#allocation11], 0
    %21 = vsyncpa [#allocation14], 0
    %22 = vsyncpa [#allocation6], 0
    %23 = vsyncpa [#allocation17], 0
    // Predicated region
    $region2: #{class_mlp_forward.1} parent=1 // pred_check
      _
    $region3: #{class_mlp_forward.1} parent=1 // pred_check_branch
      %25 = sbr.rel (0) target = $region5
    $region4: #{class_mlp_forward.1} parent=1 // pred_region
      _
    $region5: #{class_mlp_forward.1} parent=1 // pred_fallthru
      _
    // Predicated region
    $region6: #{class_mlp_forward.1} parent=1 // pred_check
      _
    $region7: #{class_mlp_forward.1} parent=1 // pred_check_branch
      %27 = sbr.rel (0) target = $region9
    $region8: #{class_mlp_forward.1} parent=1 // pred_region
      _
    $region9: #{class_mlp_forward.1} parent=1 // pred_fallthru
      _
    // Predicated region
    $region10: #{class_mlp_forward.1} parent=1 // pred_check
      _
    $region11: #{class_mlp_forward.1} parent=1 // pred_check_branch
      %29 = sbr.rel (0) target = $region13
    $region12: #{class_mlp_forward.1} parent=1 // pred_region
      %31 = vsyncadd [#allocation5], 0
      %s33 = sshll.u32 %s3, 4
      %s34 = int_to_ptr.hbm [resolvable:$true] %s33
      %s35 = sshll.u32 [#allocation4], 4
      %s36 = int_to_ptr.vmem [resolvable:$true] %s35
      %38 = dma.hbm_to_vmem [thread:$0]  %s34, 16, %s36, [#allocation5]
    $region13: #{class_mlp_forward.1} parent=1 // pred_fallthru
      _
    // Predicated region
    $region14: #{class_mlp_forward.1} parent=1 // pred_check
      _
    $region15: #{class_mlp_forward.1} parent=1 // pred_check_branch
      %40 = sbr.rel (0) target = $region17
    $region16: #{class_mlp_forward.1} parent=1 // pred_region
      %42 = vsyncadd [#allocation8], 0
      %s44 = sshll.u32 %s4, 4
      %s45 = int_to_ptr.hbm [resolvable:$true] %s44
      %s46 = sshll.u32 [#allocation7], 4
      %s47 = int_to_ptr.vmem [resolvable:$true] %s46
      %49 = dma.hbm_to_vmem [thread:$0]  %s45, 16, %s47, [#allocation8]
    $region17: #{class_mlp_forward.1} parent=1 // pred_fallthru
      _
    // Predicated region
    $region18: #{class_mlp_forward.1} parent=1 // pred_check
      _
    $region19: #{class_mlp_forward.1} parent=1 // pred_check_branch
      %51 = sbr.rel (0) target = $region21
    $region20: #{class_mlp_forward.1} parent=1 // pred_region
      %53 = vsyncadd [#allocation8], 0
      %s55 = sshll.u32 %s6, 4
      %s56 = int_to_ptr.hbm [resolvable:$true] %s55
      %s57 = sshll.u32 [#allocation9], 4
      %s58 = int_to_ptr.vmem [resolvable:$true] %s57
      %60 = dma.hbm_to_vmem [thread:$0]  %s56, 16, %s58, [#allocation8]
    $region21: #{class_mlp_forward.1} parent=1 // pred_fallthru
      _
    // Predicated region
    $region22: #{class_mlp_forward.1} parent=1 // pred_check
      _
    $region23: #{class_mlp_forward.1} parent=1 // pred_check_branch
      %62 = sbr.rel (0) target = $region25
    $region24: #{class_mlp_forward.1} parent=1 // pred_region
      %64 = vsyncadd [#allocation11], 0
      %s66 = sshll.u32 %s7, 4
      %s67 = int_to_ptr.hbm [resolvable:$true] %s66
      %s68 = sshll.u32 [#allocation10], 4
      %s69 = int_to_ptr.vmem [resolvable:$true] %s68
      %71 = dma.hbm_to_vmem [thread:$0]  %s67, 16, %s69, [#allocation11]
    $region25: #{class_mlp_forward.1} parent=1 // pred_fallthru
      _
    // Predicated region
    $region26: #{class_mlp_forward.1} parent=1 // pred_check
      _
    $region27: #{class_mlp_forward.1} parent=1 // pred_check_branch
      %73 = sbr.rel (0) target = $region29
    $region28: #{class_mlp_forward.1} parent=1 // pred_region
      %75 = vsyncadd [#allocation11], 0
      %s77 = sshll.u32 %s8, 4
      %s78 = int_to_ptr.hbm [resolvable:$true] %s77
      %s79 = sshll.u32 [#allocation12], 4
      %s80 = int_to_ptr.vmem [resolvable:$true] %s79
      %82 = dma.hbm_to_vmem [thread:$0]  %s78, 16, %s80, [#allocation11]
    $region29: #{class_mlp_forward.1} parent=1 // pred_fallthru
      _
    // Predicated region
    $region30: #{class_mlp_forward.1} parent=1 // pred_check
      _
    $region31: #{class_mlp_forward.1} parent=1 // pred_check_branch
      %84 = sbr.rel (0) target = $region33
    $region32: #{class_mlp_forward.1} parent=1 // pred_region
      %86 = vsyncadd [#allocation14], 0
      %s88 = sshll.u32 %s10, 4
      %s89 = int_to_ptr.hbm [resolvable:$true] %s88
      %s90 = sshll.u32 [#allocation13], 4
      %s91 = int_to_ptr.vmem [resolvable:$true] %s90
      %93 = dma.hbm_to_vmem [thread:$0]  %s89, 16, %s91, [#allocation14]
    $region33: #{class_mlp_forward.1} parent=1 // pred_fallthru
      _
    // Predicated region
    $region34: #{class_mlp_forward.1} parent=1 // pred_check
      _
    $region35: #{class_mlp_forward.1} parent=1 // pred_check_branch
      %95 = sbr.rel (0) target = $region37
    $region36: #{class_mlp_forward.1} parent=1 // pred_region
      %97 = dma.done [#allocation5], 16
    $region37: #{class_mlp_forward.1} parent=1 // pred_fallthru
      _
    // Predicated region
    $region38: #{class_mlp_forward.1} parent=1 // pred_check
      _
    $region39: #{class_mlp_forward.1} parent=1 // pred_check_branch
      %99 = sbr.rel (0) target = $region41
    $region40: #{class_mlp_forward.1} parent=1 // pred_region
      %101 = dma.done [#allocation8], 16
    $region41: #{class_mlp_forward.1} parent=1 // pred_fallthru
      _
    // Predicated region
    $region42: #{class_mlp_forward.1} parent=1 // pred_check
      _
    $region43: #{class_mlp_forward.1} parent=1 // pred_check_branch
      %103 = sbr.rel (0) target = $region45
    $region44: #{class_mlp_forward.1} parent=1 // pred_region
      %105 = dma.done [#allocation8], 16
    $region45: #{class_mlp_forward.1} parent=1 // pred_fallthru
      _
    // Predicated region
    $region46: #{class_mlp_forward.1} parent=1 // pred_check
      _
    $region47: #{class_mlp_forward.1} parent=1 // pred_check_branch
      %107 = sbr.rel (0) target = $region49
    $region48: #{class_mlp_forward.1} parent=1 // pred_region
      %109 = dma.done [#allocation11], 16
    $region49: #{class_mlp_forward.1} parent=1 // pred_fallthru
      _
    // Predicated region
    $region50: #{class_mlp_forward.1} parent=1 // pred_check
      _
    $region51: #{class_mlp_forward.1} parent=1 // pred_check_branch
      %111 = sbr.rel (0) target = $region53
    $region52: #{class_mlp_forward.1} parent=1 // pred_region
      %113 = dma.done [#allocation11], 16
    $region53: #{class_mlp_forward.1} parent=1 // pred_fallthru
      _
    // Predicated region
    $region54: #{class_mlp_forward.1} parent=1 // pred_check
      _
    $region55: #{class_mlp_forward.1} parent=1 // pred_check_branch
      %115 = sbr.rel (0) target = $region57
    $region56: #{class_mlp_forward.1} parent=1 // pred_region
      %117 = dma.done [#allocation14], 16
    $region57: #{class_mlp_forward.1} parent=1 // pred_fallthru
      _
    // Predicated region
    $region58: #{class_mlp_forward.1} parent=1 // pred_check
      _
    $region59: #{class_mlp_forward.1} parent=1 // pred_check_branch
      %120 = sbr.rel target = $region61
    $region60: #{class_mlp_forward.1} parent=1 // pred_region
      %121 = sst [smem:[#allocation20]] [#allocation19]
      %122 = sst [smem:[#allocation21]] [#allocation18]
    $region61: #{class_mlp_forward.1} parent=1 // pred_fallthru
      _
    %124 = shalt.err (0)
    %s126 = sshll.u32 %s1, 4
    %s127 = int_to_ptr.hbm [resolvable:$true] %s126
    %s128 = sshll.u32 [#allocation2], 4
    %s129 = int_to_ptr.vmem [resolvable:$true] %s128
    %131 = dma.hbm_to_vmem [thread:$0]  %s127, 1024, %s129, [#allocation3]
    %v132 = vld [vmem:[%s0] sm:$0xff]
    %s133 = smul.u32 4, 16
    %s134 = smul.u32 %s133, 1
    %s135 = sshll.u32 %s134, 4
    %136 = dma.done [#allocation3], %s135
    %s137 = scalar_lea.vmem [#allocation2], 64
    %s138 = scalar_lea.sflag [#allocation3], 1
    // Predicated region
    $region62: #{class_mlp_forward.1} parent=1 // pred_check
      _
    $region63: #{class_mlp_forward.1} parent=1 // pred_check_branch
      %140 = sbr.rel target = $region65
    $region64: #{class_mlp_forward.1} parent=1 // pred_region
      %141 = sst [smem:[#allocation20]] [#allocation23]
      %142 = sst [smem:[#allocation21]] [#allocation22]
    $region65: #{class_mlp_forward.1} parent=1 // pred_fallthru
      _
    %144 = shalt.err (0)
    %s146 = sshll.u32 %s5, 4
    %s147 = int_to_ptr.hbm [resolvable:$true] %s146
    %s148 = sshll.u32 %s137, 4
    %s149 = int_to_ptr.vmem [resolvable:$true] %s148
    %151 = dma.hbm_to_vmem [thread:$0]  %s147, 1024, %s149, %s138
    %v152 = vpack.c.bf16 %v132, %v132
    %v153 = vld [vmem:[#allocation2] sm:$0xf]
    %v154 = vld [vmem:[#allocation2 + $0x4] sm:$0xf]
    %v155 = vld [vmem:[#allocation2 + $0x8] sm:$0xf]
    %v156 = vld [vmem:[#allocation2 + $0xc] sm:$0xf]
    %v157 = vld [vmem:[%s2] sm:$0x1]
    %v159 = vperm.slane %v157, 0
    %v165 = vunpack.c.l.b16 %v153
    %v166 = vunpack.c.l.b16 %v154
    %v167 = vunpack.c.l.b16 %v155
    %v168 = vunpack.c.l.b16 %v156
    %v169 = vpack.c.b16 %v166, %v165
    %v170 = vpack.c.b16 %v168, %v167
    %vm173 = vcmask 261120
    %v175 = vsel %vm173, %v152, 0
    %177 = vmatpush.bf16.msra.mxu0 0
    %178 = vmatpush.bf16.msra.mxu0 0
    %179 = vmatpush.bf16.msra.mxu0 0
    %180 = vmatpush.bf16.msra.mxu0 0
    %181 = vmatpush.bf16.msra.mxu0 0
    %182 = vmatpush.bf16.msra.mxu0 0
    %183 = vmatpush.bf16.msra.mxu0 %v170
    %184 = vmatpush.bf16.msra.mxu0 %v169
    %185 = vmatmul.bf16.gmra.mxu0 %v175
    %v186 = vpop.f32.mrf.mxu0
    %v187 = vadd.f32 %v159, %v186
    %v188 = vpop.f32.mrf.mxu0
    %189 = vdwg.mxu0
    %v190 = vrot.slane %v187, 4
    %v191 = vadd.f32 %v187, %v190
    %v192 = vrot.slane %v191, 2
    %v193 = vadd.f32 %v191, %v192
    %v194 = vrot.slane %v193, 1
    %v195 = vadd.f32 %v193, %v194
    %v196 = vrcp.pop 8.0
    %v197 = vmul.f32 8.0, %v196
    %v198 = vsub.f32 1.0, %v197
    %v199 = vmul.f32 %v196, %v198
    %v200 = vadd.f32 %v196, %v199
    %vm201 = vweird.f32 %v196
    %v202 = vsel %vm201, %v196, %v200
    %v203 = vmul.f32 %v195, %v202
    %v204 = vsub.f32 %v187, %v203
    %v205 = vmul.f32 %v204, %v204
    %v206 = vrot.slane %v205, 4
    %v207 = vadd.f32 %v205, %v206
    %v208 = vrot.slane %v207, 2
    %v209 = vadd.f32 %v207, %v208
    %v210 = vrot.slane %v209, 1
    %v211 = vadd.f32 %v209, %v210
    %v212 = vmul.f32 %v211, %v202
    %v213 = vld [vmem:[#allocation4] sm:$0x1]
    %v214 = vadd.f32 %v212, 1e-05
    %v215 = vrsqrt.pop %v214
    %v216 = vmul.f32 %v215, %v214
    %v217 = vmul.f32 %v216, %v215
    %v218 = vmul.f32 0.5, %v217
    %v219 = vsub.f32 1.5, %v218
    %v220 = vmul.f32 %v215, %v219
    %vm221 = vweird.f32 %v214
    %vm222 = vweird.f32 %v215
    %vm223 = vmor %vm221, %vm222
    %v224 = vsel %vm223, %v215, %v220
    %v225 = vmul.f32 %v213, %v224
    %v227 = vperm.slane %v225, 0
    %v229 = vmul.f32 %v204, %v227
    %v230 = vld [vmem:[#allocation7] sm:$0x1]
    %v232 = vperm.slane %v230, 0
    %v234 = vadd.f32 %v229, %v232
    %v235 = vmax.f32 %v234, 0.0
    %s236 = sshll.u32 %s134, 4
    %237 = dma.done %s138, %s236
    // Predicated region
    $region66: #{class_mlp_forward.1} parent=1 // pred_check
      _
    $region67: #{class_mlp_forward.1} parent=1 // pred_check_branch
      %239 = sbr.rel target = $region69
    $region68: #{class_mlp_forward.1} parent=1 // pred_region
      %240 = sst [smem:[#allocation20]] [#allocation25]
      %241 = sst [smem:[#allocation21]] [#allocation24]
    $region69: #{class_mlp_forward.1} parent=1 // pred_fallthru
      _
    %243 = shalt.err (0)
    %s245 = sshll.u32 %s9, 4
    %s246 = int_to_ptr.hbm [resolvable:$true] %s245
    %s247 = sshll.u32 [#allocation2], 4
    %s248 = int_to_ptr.vmem [resolvable:$true] %s247
    %250 = dma.hbm_to_vmem [thread:$0]  %s246, 1024, %s248, [#allocation3]
    %v251 = vpack.c.bf16 %v235, %v235
    %v252 = vld [vmem:[%s137] sm:$0xf]
    %v253 = vld [vmem:[%s137 + $0x4] sm:$0xf]
    %v254 = vld [vmem:[%s137 + $0x8] sm:$0xf]
    %v255 = vld [vmem:[%s137 + $0xc] sm:$0xf]
    %v256 = vld [vmem:[%s137 + $0x10] sm:$0xf]
    %v257 = vld [vmem:[%s137 + $0x14] sm:$0xf]
    %v258 = vld [vmem:[%s137 + $0x18] sm:$0xf]
    %v259 = vld [vmem:[%s137 + $0x1c] sm:$0xf]
    %v260 = vld [vmem:[%s137 + $0x20] sm:$0xf]
    %v261 = vld [vmem:[%s137 + $0x24] sm:$0xf]
    %v262 = vld [vmem:[%s137 + $0x28] sm:$0xf]
    %v263 = vld [vmem:[%s137 + $0x2c] sm:$0xf]
    %v264 = vld [vmem:[%s137 + $0x30] sm:$0xf]
    %v265 = vld [vmem:[%s137 + $0x34] sm:$0xf]
    %v266 = vld [vmem:[%s137 + $0x38] sm:$0xf]
    %v267 = vld [vmem:[%s137 + $0x3c] sm:$0xf]
    %v268 = vld [vmem:[#allocation9] sm:$0x1]
    %v270 = vperm.slane %v268, 0
    %v288 = vunpack.c.l.b16 %v252
    %v289 = vunpack.c.l.b16 %v253
    %v290 = vunpack.c.l.b16 %v254
    %v291 = vunpack.c.l.b16 %v255
    %v292 = vunpack.c.l.b16 %v256
    %v293 = vunpack.c.l.b16 %v257
    %v294 = vunpack.c.l.b16 %v258
    %v295 = vunpack.c.l.b16 %v259
    %v296 = vunpack.c.l.b16 %v260
    %v297 = vunpack.c.l.b16 %v261
    %v298 = vunpack.c.l.b16 %v262
    %v299 = vunpack.c.l.b16 %v263
    %v300 = vunpack.c.l.b16 %v264
    %v301 = vunpack.c.l.b16 %v265
    %v302 = vunpack.c.l.b16 %v266
    %v303 = vunpack.c.l.b16 %v267
    %v304 = vpack.c.b16 %v289, %v288
    %v305 = vpack.c.b16 %v291, %v290
    %v306 = vpack.c.b16 %v293, %v292
    %v307 = vpack.c.b16 %v295, %v294
    %v308 = vpack.c.b16 %v297, %v296
    %v309 = vpack.c.b16 %v299, %v298
    %v310 = vpack.c.b16 %v301, %v300
    %v311 = vpack.c.b16 %v303, %v302
    %320 = vmatpush.bf16.msra.mxu0 %v311
    %321 = vmatpush.bf16.msra.mxu0 %v310
    %322 = vmatpush.bf16.msra.mxu0 %v309
    %323 = vmatpush.bf16.msra.mxu0 %v308
    %324 = vmatpush.bf16.msra.mxu0 %v307
    %325 = vmatpush.bf16.msra.mxu0 %v306
    %326 = vmatpush.bf16.msra.mxu0 %v305
    %327 = vmatpush.bf16.msra.mxu0 %v304
    %328 = vmatmul.bf16.gmra.mxu0 %v251
    %v329 = vpop.f32.mrf.mxu0
    %v330 = vadd.f32 %v270, %v329
    %v331 = vpop.f32.mrf.mxu0
    %332 = vdwg.mxu0
    %v333 = vrot.slane %v330, 4
    %v334 = vadd.f32 %v330, %v333
    %v335 = vrot.slane %v334, 2
    %v336 = vadd.f32 %v334, %v335
    %v337 = vrot.slane %v336, 1
    %v338 = vadd.f32 %v336, %v337
    %v339 = vmul.f32 %v338, %v202
    %v340 = vsub.f32 %v330, %v339
    %v341 = vmul.f32 %v340, %v340
    %v342 = vrot.slane %v341, 4
    %v343 = vadd.f32 %v341, %v342
    %v344 = vrot.slane %v343, 2
    %v345 = vadd.f32 %v343, %v344
    %v346 = vrot.slane %v345, 1
    %v347 = vadd.f32 %v345, %v346
    %v348 = vmul.f32 %v347, %v202
    %v349 = vld [vmem:[#allocation10] sm:$0x1]
    %v350 = vadd.f32 %v348, 1e-05
    %v351 = vrsqrt.pop %v350
    %v352 = vmul.f32 %v351, %v350
    %v353 = vmul.f32 %v352, %v351
    %v354 = vmul.f32 0.5, %v353
    %v355 = vsub.f32 1.5, %v354
    %v356 = vmul.f32 %v351, %v355
    %vm357 = vweird.f32 %v350
    %vm358 = vweird.f32 %v351
    %vm359 = vmor %vm357, %vm358
    %v360 = vsel %vm359, %v351, %v356
    %v361 = vmul.f32 %v349, %v360
    %v363 = vperm.slane %v361, 0
    %v365 = vmul.f32 %v340, %v363
    %v366 = vld [vmem:[#allocation12] sm:$0x1]
    %v368 = vperm.slane %v366, 0
    %v370 = vadd.f32 %v365, %v368
    %v371 = vmax.f32 %v370, 0.0
    %372 = vst [vmem:[#allocation15] sm:$0xff] %v371
    %s373 = sshll.u32 %s134, 4
    %374 = dma.done [#allocation3], %s373
    %v375 = vpack.c.bf16 %v371, %v371
    %v376 = vld [vmem:[#allocation2] sm:$0xf]
    %v377 = vld [vmem:[#allocation2 + $0x4] sm:$0xf]
    %v378 = vld [vmem:[#allocation2 + $0x8] sm:$0xf]
    %v379 = vld [vmem:[#allocation2 + $0xc] sm:$0xf]
    %v380 = vld [vmem:[#allocation2 + $0x10] sm:$0xf]
    %v381 = vld [vmem:[#allocation2 + $0x14] sm:$0xf]
    %v382 = vld [vmem:[#allocation2 + $0x18] sm:$0xf]
    %v383 = vld [vmem:[#allocation2 + $0x1c] sm:$0xf]
    %v384 = vld [vmem:[#allocation2 + $0x20] sm:$0xf]
    %v385 = vld [vmem:[#allocation2 + $0x24] sm:$0xf]
    %v386 = vld [vmem:[#allocation2 + $0x28] sm:$0xf]
    %v387 = vld [vmem:[#allocation2 + $0x2c] sm:$0xf]
    %v388 = vld [vmem:[#allocation2 + $0x30] sm:$0xf]
    %v389 = vld [vmem:[#allocation2 + $0x34] sm:$0xf]
    %v390 = vld [vmem:[#allocation2 + $0x38] sm:$0xf]
    %v391 = vld [vmem:[#allocation2 + $0x3c] sm:$0xf]
    %v392 = vld [vmem:[#allocation13] sm:$0x1]
    %v394 = vperm.slane %v392, 0
    %v412 = vunpack.c.l.b16 %v376
    %v413 = vunpack.c.l.b16 %v377
    %v414 = vunpack.c.l.b16 %v378
    %v415 = vunpack.c.l.b16 %v379
    %v416 = vunpack.c.l.b16 %v380
    %v417 = vunpack.c.l.b16 %v381
    %v418 = vunpack.c.l.b16 %v382
    %v419 = vunpack.c.l.b16 %v383
    %v420 = vunpack.c.l.b16 %v384
    %v421 = vunpack.c.l.b16 %v385
    %v422 = vunpack.c.l.b16 %v386
    %v423 = vunpack.c.l.b16 %v387
    %v424 = vunpack.c.l.b16 %v388
    %v425 = vunpack.c.l.b16 %v389
    %v426 = vunpack.c.l.b16 %v390
    %v427 = vunpack.c.l.b16 %v391
    %v428 = vpack.c.b16 %v413, %v412
    %v429 = vpack.c.b16 %v415, %v414
    %v430 = vpack.c.b16 %v417, %v416
    %v431 = vpack.c.b16 %v419, %v418
    %v432 = vpack.c.b16 %v421, %v420
    %v433 = vpack.c.b16 %v423, %v422
    %v434 = vpack.c.b16 %v425, %v424
    %v435 = vpack.c.b16 %v427, %v426
    %444 = vmatpush.bf16.msra.mxu0 %v435
    %445 = vmatpush.bf16.msra.mxu0 %v434
    %446 = vmatpush.bf16.msra.mxu0 %v433
    %447 = vmatpush.bf16.msra.mxu0 %v432
    %448 = vmatpush.bf16.msra.mxu0 %v431
    %449 = vmatpush.bf16.msra.mxu0 %v430
    %450 = vmatpush.bf16.msra.mxu0 %v429
    %451 = vmatpush.bf16.msra.mxu0 %v428
    %452 = vmatmul.bf16.gmra.mxu0 %v375
    %v453 = vpop.f32.mrf.mxu0
    %v454 = vadd.f32 %v394, %v453
    %v455 = vpop.f32.mrf.mxu0
    %456 = vdwg.mxu0
    %457 = vst [vmem:[#allocation16] sm:$0xff] %v454
    // Predicated region
    $region70: #{class_mlp_forward.1} parent=1 // pred_check
      _
    $region71: #{class_mlp_forward.1} parent=1 // pred_check_branch
      %459 = sbr.rel (0) target = $region73
    $region72: #{class_mlp_forward.1} parent=1 // pred_region
      %461 = vsyncadd [#allocation6], 0
      %s463 = sshll.u32 [#allocation15], 4
      %s464 = int_to_ptr.vmem [resolvable:$true] %s463
      %s465 = sshll.u32 %s11, 4
      %s466 = int_to_ptr.hbm [resolvable:$true] %s465
      %468 = dma.vmem_to_hbm [thread:$0]  %s464, 128, %s466, [#allocation6]
    $region73: #{class_mlp_forward.1} parent=1 // pred_fallthru
      _
    // Predicated region
    $region74: #{class_mlp_forward.1} parent=1 // pred_check
      _
    $region75: #{class_mlp_forward.1} parent=1 // pred_check_branch
      %470 = sbr.rel (0) target = $region77
    $region76: #{class_mlp_forward.1} parent=1 // pred_region
      %472 = vsyncadd [#allocation17], 0
      %s474 = sshll.u32 [#allocation16], 4
      %s475 = int_to_ptr.vmem [resolvable:$true] %s474
      %s476 = sshll.u32 %s12, 4
      %s477 = int_to_ptr.hbm [resolvable:$true] %s476
      %479 = dma.vmem_to_hbm [thread:$0]  %s475, 128, %s477, [#allocation17]
    $region77: #{class_mlp_forward.1} parent=1 // pred_fallthru
      _
    // Predicated region
    $region78: #{class_mlp_forward.1} parent=1 // pred_check
      _
    $region79: #{class_mlp_forward.1} parent=1 // pred_check_branch
      %481 = sbr.rel (0) target = $region81
    $region80: #{class_mlp_forward.1} parent=1 // pred_region
      %483 = dma.done [#allocation6], 128
    $region81: #{class_mlp_forward.1} parent=1 // pred_fallthru
      _
    // Predicated region
    $region82: #{class_mlp_forward.1} parent=1 // pred_check
      _
    $region83: #{class_mlp_forward.1} parent=1 // pred_check_branch
      %485 = sbr.rel (0) target = $region85
    $region84: #{class_mlp_forward.1} parent=1 // pred_region
      %487 = dma.done [#allocation17], 128
    $region85: #{class_mlp_forward.1} parent=1 // pred_fallthru
      _
    %488 = vsyncpa [#allocation5], 1
    %489 = vsyncpa [#allocation8], 1
    %490 = vsyncpa [#allocation11], 1
    %491 = vsyncpa [#allocation14], 1
    %492 = vsyncpa [#allocation6], 1
    %493 = vsyncpa [#allocation17], 1
  %494 = vsyncmov [#allocation3]
  %s495 = vpop.sfrf %494
  %p496 = scmp.eq.s32.totalorder %s495, 0
  %p497 = pneg %p496
  %499 = shalt.err (%p497)
  %s500 = scalar_lea.sflag [#allocation3], 1
  %501 = vsyncmov %s500
  %s502 = vpop.sfrf %501
  %p503 = scmp.eq.s32.totalorder %s502, 0
  %p504 = pneg %p503
  %506 = shalt.err (%p504)

</llo_original>
